<compile_context>
chip_gen: v6e
topology: v6e:2x2x1
jax: 0.10.0
libtpu: 0.0.40
codegen_flags: <defaults>
</compile_context>

<pallas_src>
import functools

import jax
import jax.numpy as jnp
from jax import lax
from jax.experimental import pallas as pl
from jax.experimental.pallas import tpu as pltpu


def _znet_kernel(x_ref, w1_ref, b1_ref, w2_ref, b2_ref, w3_ref, b3_ref,
                 o_ref, *, matmul_dtype):
    """Fused MLP forward for one batch tile (batch ends up on the lane axis).

    x_ref : (block_b, z_dim)   natural layout, no wrapper transpose
    w1_ref: (latent, z_dim)    b1_ref: (latent, 1)
    w2_ref: (latent, latent)   b2_ref: (latent, 1)
    w3_ref: (latent, 1)        b3_ref: (1, 1)  [SMEM scalar]
    o_ref : (1, block_b)       lane-dense output block
    """
    x = x_ref[...].astype(matmul_dtype)                     # (block_b, z_dim)

    # Layer 1: h = W1 @ x^T  -> (latent, block_b).
    # Contract feature axes of both operands (same MXU pattern as dot(a, b.T));
    # no materialized transpose of the batch tile.
    h = lax.dot_general(w1_ref[...], x, (((1,), (1,)), ((), ())),
                        preferred_element_type=jnp.float32)
    h = h + b1_ref[...]
    h = jnp.maximum(h, 0.1 * h)                             # LeakyReLU(0.1)

    # Layer 2: W2 @ h + b2 -> (latent, block_b)
    h = jnp.dot(w2_ref[...], h.astype(matmul_dtype),
                preferred_element_type=jnp.float32)
    h = h + b2_ref[...]
    h = jnp.maximum(h, 0.1 * h)

    # Layer 3: out_features == 1 -> VPU multiply + sublane reduce instead of a
    # 1-column MXU matmul; result is already lane-dense (1, block_b).
    out = jnp.sum(w3_ref[...] * h, axis=0, keepdims=True) + b3_ref[0, 0]
    o_ref[...] = out.astype(o_ref.dtype)


def _round_up(x, m):
    return ((x + m - 1) // m) * m


def _pick_block_b(batch):
    """Batch tile: multiple of 128 (lane-dense output), large enough to
    amortize per-step overhead, but keep >=2 grid steps when possible so
    v7x's two TensorCores both get work. Per-step VMEM is tiny (<~2 MB even
    at block_b=2048), so the cap is occupancy/step-count driven, not VMEM."""
    if batch <= 128:
        return 128
    return min(2048, _round_up(pl.cdiv(batch, 2), 128))


@functools.partial(jax.jit, static_argnames=("block_b", "use_bf16"))
def znet_forward(z, w1, b1, w2, b2, w3, b3, block_b=None, use_bf16=True):
    """Z_net forward as one fused Pallas kernel.

    z : (B, z_dim) float32
    Weights use PyTorch's native storage layout:
      w1: (latent, z_dim)   b1: (latent,)
      w2: (latent, latent)  b2: (latent,)
      w3: (1, latent)       b3: (1,)
    returns (B, 1) float32
    """
    B, z_dim = z.shape
    latent = w1.shape[0]

    if block_b is None:
        block_b = _pick_block_b(B)
    n_blocks = pl.cdiv(B, block_b)

    matmul_dtype = jnp.bfloat16 if use_bf16 else jnp.float32
    # Pre-cast the grid-invariant matmul weights once (tiny arrays) instead of
    # re-casting them inside the kernel on every grid step.
    w1m = w1.astype(matmul_dtype)
    w2m = w2.astype(matmul_dtype)

    # Biases and the last-layer weight stay f32: they feed the f32 accumulator
    # and the VPU (v5e has no bf16 VPU path).
    b1c = b1.reshape(latent, 1).astype(jnp.float32)
    b2c = b2.reshape(latent, 1).astype(jnp.float32)
    w3c = w3.reshape(latent, 1).astype(jnp.float32)
    b3c = b3.reshape(1, 1).astype(jnp.float32)

    kernel = functools.partial(_znet_kernel, matmul_dtype=matmul_dtype)

    # Weights/biases are tiny and grid-invariant -> full blocks, same block
    # index for every grid step (fetched once, stay VMEM-resident).
    full = lambda shape: pl.BlockSpec(shape, lambda i: (0, 0))

    out = pl.pallas_call(
        kernel,
        out_shape=jax.ShapeDtypeStruct((1, B), jnp.float32),
        grid=(n_blocks,),
        in_specs=[
            # z in its natural (B, z_dim) layout: no wrapper pad/transpose.
            # Ragged tail handled by Pallas edge-block padding; padded rows are
            # independent and never written back (no cross-batch reduction).
            pl.BlockSpec((block_b, z_dim), lambda i: (i, 0)),
            full((latent, z_dim)),
            full((latent, 1)),
            full((latent, latent)),
            full((latent, 1)),
            full((latent, 1)),
            pl.BlockSpec(memory_space=pltpu.MemorySpace.SMEM),  # scalar b3
        ],
        out_specs=pl.BlockSpec((1, block_b), lambda i: (0, i)),
        compiler_params=pltpu.CompilerParams(
            dimension_semantics=("parallel",)),
    )(z, w1m, b1c, w2m, b2c, w3c, b3c)

    # (1, B) -> (B, 1): identical row-major order, metadata-only reshape.
    return out.reshape(B, 1)


def _init_linear(key, fan_in, fan_out):
    """Deterministic init mimicking PyTorch nn.Linear defaults:
    U(-1/sqrt(fan_in), 1/sqrt(fan_in)); weight stored as (out, in)."""
    kw, kb = jax.random.split(key)
    bound = 1.0 / jnp.sqrt(jnp.float32(fan_in))
    w = jax.random.uniform(kw, (fan_out, fan_in), jnp.float32, -bound, bound)
    b = jax.random.uniform(kb, (fan_out,), jnp.float32, -bound, bound)
    return w, b


def _reference_forward(z, w1, b1, w2, b2, w3, b3):
    """Pure-JAX reference (mirrors the PyTorch forward) for validation."""
    h = z @ w1.T + b1
    h = jnp.where(h > 0, h, 0.1 * h)
    h = h @ w2.T + b2
    h = jnp.where(h > 0, h, 0.1 * h)
    return h @ w3.T + b3


if __name__ == "__main__":
    key = jax.random.PRNGKey(0)
    k_in, k1, k2, k3 = jax.random.split(key, 4)

    # z_dim=16, latent_dim=128 (module default). B=300 is deliberately not a
    # multiple of the batch tile: with the adaptive tile (256) this gives a
    # 2-step grid (both v7x TCs busy) and exercises the ragged-tail edge block.
    B, z_dim, latent = 300, 16, 128

    z = jax.random.normal(k_in, (B, z_dim), jnp.float32)
    w1, b1 = _init_linear(k1, z_dim, latent)
    w2, b2 = _init_linear(k2, latent, latent)
    w3, b3 = _init_linear(k3, latent, 1)

    ref = _reference_forward(z, w1, b1, w2, b2, w3, b3)

    # f32 matmul path: tight match with the PyTorch-equivalent reference.
    out_f32 = jax.block_until_ready(
        znet_forward(z, w1, b1, w2, b2, w3, b3, use_bf16=False))
    assert out_f32.shape == (B, 1)
    assert jnp.allclose(out_f32, ref, atol=1e-4, rtol=1e-4), "f32 mismatch"

    # bf16-matmul performance default: f32 accumulation, looser tolerance.
    out_bf16 = jax.block_until_ready(
        znet_forward(z, w1, b1, w2, b2, w3, b3))
    assert out_bf16.shape == (B, 1)
    assert jnp.allclose(out_bf16, ref, atol=5e-2, rtol=5e-2), "bf16 mismatch"

    print("KERNEL_OK")
</pallas_src>

<mosaic_0001>
module attributes {stable_mosaic.version = 11 : i64} {
  func.func @_znet_kernel(%arg0: i32, %arg1: memref<256x16xf32, #tpu.memory_space<vmem>>, %arg2: memref<128x16xf32, #tpu.memory_space<vmem>>, %arg3: memref<128x1xf32, #tpu.memory_space<vmem>>, %arg4: memref<128x128xf32, #tpu.memory_space<vmem>>, %arg5: memref<128x1xf32, #tpu.memory_space<vmem>>, %arg6: memref<128x1xf32, #tpu.memory_space<vmem>>, %arg7: memref<1x1xf32, #tpu.memory_space<smem>>, %arg8: memref<1x256xf32, #tpu.memory_space<vmem>>) attributes {dimension_semantics = [#tpu.dimension_semantics<parallel>], iteration_bounds = array<i64: 2>, scalar_prefetch = 0 : i64, scratch_operands = 0 : i64, tpu.core_type = #tpu.core_type<tc>, window_params = [{transform_indices = @transform_0, window_bounds = array<i64: 256, 16>}, {pipeline_mode = #tpu.pipeline_mode<synchronous>, transform_indices = @transform_1, window_bounds = array<i64: 128, 16>}, {pipeline_mode = #tpu.pipeline_mode<synchronous>, transform_indices = @transform_2, window_bounds = array<i64: 128, 1>}, {pipeline_mode = #tpu.pipeline_mode<synchronous>, transform_indices = @transform_3, window_bounds = array<i64: 128, 128>}, {pipeline_mode = #tpu.pipeline_mode<synchronous>, transform_indices = @transform_4, window_bounds = array<i64: 128, 1>}, {pipeline_mode = #tpu.pipeline_mode<synchronous>, transform_indices = @transform_5, window_bounds = array<i64: 128, 1>}, {transform_indices = @transform_6, window_bounds = array<i64: 1, 1>}, {transform_indices = @transform_7, window_bounds = array<i64: 1, 256>}]} {
    %c0 = arith.constant 0 : index
    %c0_0 = arith.constant 0 : index
    %0 = vector.load %arg1[%c0, %c0_0] : memref<256x16xf32, #tpu.memory_space<vmem>>, vector<256x16xf32>
    %c0_1 = arith.constant 0 : index
    %c0_2 = arith.constant 0 : index
    %1 = vector.load %arg2[%c0_1, %c0_2] : memref<128x16xf32, #tpu.memory_space<vmem>>, vector<128x16xf32>
    %cst = arith.constant dense<0.000000e+00> : vector<128x256xf32>
    %2 = tpu.matmul %1, %0, %cst {dimension_numbers = #tpu.dot_dimension_numbers<[1], [1], [0], [0], [0, 0, 1, 0], [], []>} : vector<128x16xf32>, vector<256x16xf32>, vector<128x256xf32> -> vector<128x256xf32>
    %c0_3 = arith.constant 0 : index
    %c0_4 = arith.constant 0 : index
    %3 = vector.load %arg3[%c0_3, %c0_4] : memref<128x1xf32, #tpu.memory_space<vmem>>, vector<128x1xf32>
    %4 = vector.broadcast %3 : vector<128x1xf32> to vector<128x256xf32>
    %5 = arith.addf %2, %4 : vector<128x256xf32>
    %cst_5 = arith.constant 1.000000e-01 : f32
    %6 = vector.broadcast %cst_5 : f32 to vector<128x256xf32>
    %7 = arith.mulf %6, %5 : vector<128x256xf32>
    %8 = arith.maximumf %5, %7 : vector<128x256xf32>
    %c0_6 = arith.constant 0 : index
    %c0_7 = arith.constant 0 : index
    %9 = vector.load %arg4[%c0_6, %c0_7] : memref<128x128xf32, #tpu.memory_space<vmem>>, vector<128x128xf32>
    %cst_8 = arith.constant dense<0.000000e+00> : vector<128x256xf32>
    %10 = tpu.matmul %9, %8, %cst_8 {dimension_numbers = #tpu.dot_dimension_numbers<[1], [0], [0], [1], [0, 0, 1, 1], [], []>} : vector<128x128xf32>, vector<128x256xf32>, vector<128x256xf32> -> vector<128x256xf32>
    %c0_9 = arith.constant 0 : index
    %c0_10 = arith.constant 0 : index
    %11 = vector.load %arg5[%c0_9, %c0_10] : memref<128x1xf32, #tpu.memory_space<vmem>>, vector<128x1xf32>
    %12 = vector.broadcast %11 : vector<128x1xf32> to vector<128x256xf32>
    %13 = arith.addf %10, %12 : vector<128x256xf32>
    %cst_11 = arith.constant 1.000000e-01 : f32
    %14 = vector.broadcast %cst_11 : f32 to vector<128x256xf32>
    %15 = arith.mulf %14, %13 : vector<128x256xf32>
    %16 = arith.maximumf %13, %15 : vector<128x256xf32>
    %c0_12 = arith.constant 0 : index
    %c0_13 = arith.constant 0 : index
    %17 = vector.load %arg6[%c0_12, %c0_13] : memref<128x1xf32, #tpu.memory_space<vmem>>, vector<128x1xf32>
    %18 = vector.broadcast %17 : vector<128x1xf32> to vector<128x256xf32>
    %19 = arith.mulf %18, %16 : vector<128x256xf32>
    %cst_14 = arith.constant dense<0.000000e+00> : vector<256xf32>
    %20 = vector.multi_reduction <add>, %19, %cst_14 [0] : vector<128x256xf32> to vector<256xf32>
    %21 = vector.shape_cast %20 : vector<256xf32> to vector<1x256xf32>
    %c0_15 = arith.constant 0 : index
    %c0_16 = arith.constant 0 : index
    %22 = memref.load %arg7[%c0_15, %c0_16] : memref<1x1xf32, #tpu.memory_space<smem>>
    %23 = vector.broadcast %22 : f32 to vector<1x256xf32>
    %24 = arith.addf %21, %23 : vector<1x256xf32>
    %c0_17 = arith.constant 0 : index
    %c0_18 = arith.constant 0 : index
    %25 = vector.load %arg8[%c0_17, %c0_18] : memref<1x256xf32, #tpu.memory_space<vmem>>, vector<1x256xf32>
    tpu.vector_store %arg8[%c0_17, %c0_18], %24 {strides = array<i32>} : memref<1x256xf32, #tpu.memory_space<vmem>>, vector<1x256xf32>,
    return
  }
  func.func @transform_0(%arg0: i32) -> (i32, i32) {
    %c0_i32 = arith.constant 0 : i32
    %c0_i32_0 = arith.constant 0 : i32
    return %arg0, %c0_i32 : i32, i32
  }
  func.func @transform_1(%arg0: i32) -> (i32, i32) {
    %c0_i32 = arith.constant 0 : i32
    %c0_i32_0 = arith.constant 0 : i32
    %c0_i32_1 = arith.constant 0 : i32
    return %c0_i32, %c0_i32_0 : i32, i32
  }
  func.func @transform_2(%arg0: i32) -> (i32, i32) {
    %c0_i32 = arith.constant 0 : i32
    %c0_i32_0 = arith.constant 0 : i32
    %c0_i32_1 = arith.constant 0 : i32
    return %c0_i32, %c0_i32_0 : i32, i32
  }
  func.func @transform_3(%arg0: i32) -> (i32, i32) {
    %c0_i32 = arith.constant 0 : i32
    %c0_i32_0 = arith.constant 0 : i32
    %c0_i32_1 = arith.constant 0 : i32
    return %c0_i32, %c0_i32_0 : i32, i32
  }
  func.func @transform_4(%arg0: i32) -> (i32, i32) {
    %c0_i32 = arith.constant 0 : i32
    %c0_i32_0 = arith.constant 0 : i32
    %c0_i32_1 = arith.constant 0 : i32
    return %c0_i32, %c0_i32_0 : i32, i32
  }
  func.func @transform_5(%arg0: i32) -> (i32, i32) {
    %c0_i32 = arith.constant 0 : i32
    %c0_i32_0 = arith.constant 0 : i32
    %c0_i32_1 = arith.constant 0 : i32
    return %c0_i32, %c0_i32_0 : i32, i32
  }
  func.func @transform_6(%arg0: i32) -> (i32, i32) {
    %c0_i32 = arith.constant 0 : i32
    %c0_i32_0 = arith.constant 0 : i32
    %c0_i32_1 = arith.constant 0 : i32
    return %c0_i32, %c0_i32_0 : i32, i32
  }
  func.func @transform_7(%arg0: i32) -> (i32, i32) {
    %c0_i32 = arith.constant 0 : i32
    %c0_i32_0 = arith.constant 0 : i32
    return %c0_i32, %arg0 : i32, i32
  }
}

</mosaic_0001>

<llo_original>
// kernel: znet_forward.1
$region0: #{znet_forward.1}
  #allocation0 [shape = 'u32[]', space=smem, size = 0x4, offset = 0x4, fixed_abs, tag = 'smem constant byte address 0x4 - core index']
  #allocation1 [shape = 'u32[144,128]{1,0:T(1,128)}', space=vmem, size = 0x12000, scoped, tag = 'internal scratch']
  #allocation2 [shape = 'f32[1,1]{1,0:T(1,128)S(6)}', space=smem, size = 0x200, scoped, tag = 'scoped memory for znet_forward.1']
  %s0 = inlined_call_operand.vmem [shape: f32[300,16], index: 0, kind: input, shape index: {}]
  %s1 = inlined_call_operand.vmem [shape: f32[128,16], index: 1, kind: input, shape index: {}]
  %s2 = inlined_call_operand.vmem [shape: f32[128,1], index: 2, kind: input, shape index: {}]
  %s3 = inlined_call_operand.vmem [shape: f32[128,128], index: 3, kind: input, shape index: {}]
  %s4 = inlined_call_operand.vmem [shape: f32[128,1], index: 4, kind: input, shape index: {}]
  %s5 = inlined_call_operand.vmem [shape: f32[128,1], index: 5, kind: input, shape index: {}]
  %s6 = inlined_call_operand.<no memory space> [shape: f32[1,1], index: 6, kind: input, shape index: {}]
  %s7 = inlined_call_operand.hbm [shape: f32[1,300], index: 7, kind: output, shape index: {}]
  %s8 = sld [smem:[#allocation0]]
  $region61: #{znet_forward.1} parent=0
    _
  %s10 = ssub.s32 1, %s8
  %s11 = scalar_select 0, %s10, %s8
  %12 = sst [smem:[#allocation2]] %s6
  $region1: #{znet_forward.1} parent=0
    #allocation3 [shape = 'u8[2048]{0}', space=vmem, size = 0x800, scoped, tag = 'output window, operand 0']
    #allocation4 [shape = 's32[2]{0}', space=sflag, size = 0x8, scoped, tag = 'scoped memory for znet_forward.1']
    %13 = vsyncpa [#allocation4], 0
    %s14 = scalar_lea.sflag [#allocation4], 1
    %15 = vsyncpa %s14, 0
    loop: start=0, step=1, limit=4
    $region2: #{znet_forward.1} parent=1 // loop_pre_header
      _
    $region3: #{znet_forward.1} parent=1 // loop_header
      %s17 = sphi 0, %s21
      %p18 = scmp.ge.s32.totalorder %s17, 4
      %s27 = sphi 0, %s29
      %s30 = sphi 0, %s27
      %s31 = sphi 0, %s30
      %s47 = sphi 0, %s31
      %s51 = sphi 0, %s51
      %s53 = sphi 0, %s51
      %s54 = sphi 0, %s53
      %s68 = sphi 0, %s54
      %s72 = sphi 0, %s72
      %s74 = sphi 0, %s72
      %s75 = sphi 0, %s74
      %s89 = sphi 0, %s75
      %s93 = sphi 0, %s93
      %s95 = sphi 0, %s93
      %s96 = sphi 0, %s95
      %s110 = sphi 0, %s96
      %s114 = sphi 0, %s114
      %s116 = sphi 0, %s114
      %s117 = sphi 0, %s116
      %s131 = sphi 0, %s117
      %s135 = sphi 0, %s135
      %s137 = sphi 0, %s135
      %s138 = sphi 0, %s137
      %s152 = sphi 0, %s138
      %s156 = sphi 0, %s156
      %s158 = sphi 0, %s156
      %s159 = sphi 0, %s158
      %s173 = sphi 0, %s159
      %s179 = sphi 0, %s181
      %s182 = sphi 0, %s179
      %s183 = sphi 0, %s182
      %s199 = sphi 0, %s183
    $region4: #{znet_forward.1} parent=1 // loop_header_branch
      %20 = sbr.rel (%p18) target = $region8
    $region5: #{znet_forward.1} parent=1 // loop_body
      %s22 = ssub.s32 %s17, 1
      %s23 = ssub.s32 %s17, 2
      %s24 = sadd.s32 %s17, 1
      %s25 = ssub.s32 %s17, %s24
      %p26 = scmp.eq.s32.totalorder %s25, 0
      %s28 = sadd.s32 %s27, 1
      %s29 = scalar_select %p26, %s27, %s28
      %p32 = pneg %p26
      %p33 = scmp.eq.s32.totalorder %s17, 1
      %p34 = por %p32, %p33
      %p35 = scmp.ne.s32.totalorder %s27, %s30
      %p36 = scmp.eq.s32.totalorder %s17, 0
      %p37 = por %p35, %p36
      %p38 = scmp.ne.s32.totalorder %s27, %s30
      %p39 = scmp.eq.s32.totalorder %s22, 1
      %p40 = por %p38, %p39
      %p41 = scmp.ne.s32.totalorder %s30, %s31
      %p42 = scmp.eq.s32.totalorder %s22, 0
      %p43 = por %p41, %p42
      %p44 = scmp.ne.s32.totalorder %s30, %s31
      %p45 = scmp.eq.s32.totalorder %s23, 1
      %p46 = por %p44, %p45
      %p48 = scmp.ne.s32.totalorder %s31, %s47
      %p49 = scmp.eq.s32.totalorder %s23, 0
      %p50 = por %p48, %p49
      %s52 = sadd.s32 %s51, 1
      %p55 = scmp.eq.s32.totalorder %s17, 1
      %p56 = scmp.ne.s32.totalorder %s51, %s53
      %p57 = scmp.eq.s32.totalorder %s17, 0
      %p58 = por %p56, %p57
      %p59 = scmp.ne.s32.totalorder %s51, %s53
      %p60 = scmp.eq.s32.totalorder %s22, 1
      %p61 = por %p59, %p60
      %p62 = scmp.ne.s32.totalorder %s53, %s54
      %p63 = scmp.eq.s32.totalorder %s22, 0
      %p64 = por %p62, %p63
      %p65 = scmp.ne.s32.totalorder %s53, %s54
      %p66 = scmp.eq.s32.totalorder %s23, 1
      %p67 = por %p65, %p66
      %p69 = scmp.ne.s32.totalorder %s54, %s68
      %p70 = scmp.eq.s32.totalorder %s23, 0
      %p71 = por %p69, %p70
      %s73 = sadd.s32 %s72, 1
      %p76 = scmp.eq.s32.totalorder %s17, 1
      %p77 = scmp.ne.s32.totalorder %s72, %s74
      %p78 = scmp.eq.s32.totalorder %s17, 0
      %p79 = por %p77, %p78
      %p80 = scmp.ne.s32.totalorder %s72, %s74
      %p81 = scmp.eq.s32.totalorder %s22, 1
      %p82 = por %p80, %p81
      %p83 = scmp.ne.s32.totalorder %s74, %s75
      %p84 = scmp.eq.s32.totalorder %s22, 0
      %p85 = por %p83, %p84
      %p86 = scmp.ne.s32.totalorder %s74, %s75
      %p87 = scmp.eq.s32.totalorder %s23, 1
      %p88 = por %p86, %p87
      %p90 = scmp.ne.s32.totalorder %s75, %s89
      %p91 = scmp.eq.s32.totalorder %s23, 0
      %p92 = por %p90, %p91
      %s94 = sadd.s32 %s93, 1
      %p97 = scmp.eq.s32.totalorder %s17, 1
      %p98 = scmp.ne.s32.totalorder %s93, %s95
      %p99 = scmp.eq.s32.totalorder %s17, 0
      %p100 = por %p98, %p99
      %p101 = scmp.ne.s32.totalorder %s93, %s95
      %p102 = scmp.eq.s32.totalorder %s22, 1
      %p103 = por %p101, %p102
      %p104 = scmp.ne.s32.totalorder %s95, %s96
      %p105 = scmp.eq.s32.totalorder %s22, 0
      %p106 = por %p104, %p105
      %p107 = scmp.ne.s32.totalorder %s95, %s96
      %p108 = scmp.eq.s32.totalorder %s23, 1
      %p109 = por %p107, %p108
      %p111 = scmp.ne.s32.totalorder %s96, %s110
      %p112 = scmp.eq.s32.totalorder %s23, 0
      %p113 = por %p111, %p112
      %s115 = sadd.s32 %s114, 1
      %p118 = scmp.eq.s32.totalorder %s17, 1
      %p119 = scmp.ne.s32.totalorder %s114, %s116
      %p120 = scmp.eq.s32.totalorder %s17, 0
      %p121 = por %p119, %p120
      %p122 = scmp.ne.s32.totalorder %s114, %s116
      %p123 = scmp.eq.s32.totalorder %s22, 1
      %p124 = por %p122, %p123
      %p125 = scmp.ne.s32.totalorder %s116, %s117
      %p126 = scmp.eq.s32.totalorder %s22, 0
      %p127 = por %p125, %p126
      %p128 = scmp.ne.s32.totalorder %s116, %s117
      %p129 = scmp.eq.s32.totalorder %s23, 1
      %p130 = por %p128, %p129
      %p132 = scmp.ne.s32.totalorder %s117, %s131
      %p133 = scmp.eq.s32.totalorder %s23, 0
      %p134 = por %p132, %p133
      %s136 = sadd.s32 %s135, 1
      %p139 = scmp.eq.s32.totalorder %s17, 1
      %p140 = scmp.ne.s32.totalorder %s135, %s137
      %p141 = scmp.eq.s32.totalorder %s17, 0
      %p142 = por %p140, %p141
      %p143 = scmp.ne.s32.totalorder %s135, %s137
      %p144 = scmp.eq.s32.totalorder %s22, 1
      %p145 = por %p143, %p144
      %p146 = scmp.ne.s32.totalorder %s137, %s138
      %p147 = scmp.eq.s32.totalorder %s22, 0
      %p148 = por %p146, %p147
      %p149 = scmp.ne.s32.totalorder %s137, %s138
      %p150 = scmp.eq.s32.totalorder %s23, 1
      %p151 = por %p149, %p150
      %p153 = scmp.ne.s32.totalorder %s138, %s152
      %p154 = scmp.eq.s32.totalorder %s23, 0
      %p155 = por %p153, %p154
      %s157 = sadd.s32 %s156, 1
      %p160 = scmp.eq.s32.totalorder %s17, 1
      %p161 = scmp.ne.s32.totalorder %s156, %s158
      %p162 = scmp.eq.s32.totalorder %s17, 0
      %p163 = por %p161, %p162
      %p164 = scmp.ne.s32.totalorder %s156, %s158
      %p165 = scmp.eq.s32.totalorder %s22, 1
      %p166 = por %p164, %p165
      %p167 = scmp.ne.s32.totalorder %s158, %s159
      %p168 = scmp.eq.s32.totalorder %s22, 0
      %p169 = por %p167, %p168
      %p170 = scmp.ne.s32.totalorder %s158, %s159
      %p171 = scmp.eq.s32.totalorder %s23, 1
      %p172 = por %p170, %p171
      %p174 = scmp.ne.s32.totalorder %s159, %s173
      %p175 = scmp.eq.s32.totalorder %s23, 0
      %p176 = por %p174, %p175
      %s177 = ssub.s32 %s17, %s24
      %p178 = scmp.eq.s32.totalorder %s177, 0
      %s180 = sadd.s32 %s179, 1
      %s181 = scalar_select %p178, %s179, %s180
      %p184 = pneg %p178
      %p185 = scmp.eq.s32.totalorder %s17, 1
      %p186 = por %p184, %p185
      %p187 = scmp.ne.s32.totalorder %s179, %s182
      %p188 = scmp.eq.s32.totalorder %s17, 0
      %p189 = por %p187, %p188
      %p190 = scmp.ne.s32.totalorder %s179, %s182
      %p191 = scmp.eq.s32.totalorder %s22, 1
      %p192 = por %p190, %p191
      %p193 = scmp.ne.s32.totalorder %s182, %s183
      %p194 = scmp.eq.s32.totalorder %s22, 0
      %p195 = por %p193, %p194
      %p196 = scmp.ne.s32.totalorder %s182, %s183
      %p197 = scmp.eq.s32.totalorder %s23, 1
      %p198 = por %p196, %p197
      %p200 = scmp.ne.s32.totalorder %s183, %s199
      %p201 = scmp.eq.s32.totalorder %s23, 0
      %p202 = por %p200, %p201
      %p203 = scmp.le.s32.totalorder 1, %s17
      %p204 = scmp.lt.s32.totalorder %s17, 3
      %p205 = pnand %p203, %p204
      %p206 = pneg %p205
      // Predicated region
      $region9: #{znet_forward.1} parent=5 // pred_check
        _
      $region10: #{znet_forward.1} parent=5 // pred_check_branch
        %208 = sbr.rel (%p205) target = $region12
      $region11: #{znet_forward.1} parent=5 // pred_region
        %s209 = ssub.s32 %s17, 1
        // Predicated region
        $region13: #{znet_forward.1} parent=11 // pred_check
          %p210 = pneg %p64
        $region14: #{znet_forward.1} parent=11 // pred_check_branch
          %212 = sbr.rel (%p210) target = $region16
        $region15: #{znet_forward.1} parent=11 // pred_region
          _
        $region16: #{znet_forward.1} parent=11 // pred_fallthru
          _
        // Predicated region
        $region17: #{znet_forward.1} parent=11 // pred_check
          %p213 = pneg %p85
        $region18: #{znet_forward.1} parent=11 // pred_check_branch
          %215 = sbr.rel (%p213) target = $region20
        $region19: #{znet_forward.1} parent=11 // pred_region
          _
        $region20: #{znet_forward.1} parent=11 // pred_fallthru
          _
        // Predicated region
        $region21: #{znet_forward.1} parent=11 // pred_check
          %p216 = pneg %p106
        $region22: #{znet_forward.1} parent=11 // pred_check_branch
          %218 = sbr.rel (%p216) target = $region24
        $region23: #{znet_forward.1} parent=11 // pred_region
          _
        $region24: #{znet_forward.1} parent=11 // pred_fallthru
          _
        // Predicated region
        $region25: #{znet_forward.1} parent=11 // pred_check
          %p219 = pneg %p127
        $region26: #{znet_forward.1} parent=11 // pred_check_branch
          %221 = sbr.rel (%p219) target = $region28
        $region27: #{znet_forward.1} parent=11 // pred_region
          _
        $region28: #{znet_forward.1} parent=11 // pred_fallthru
          _
        // Predicated region
        $region29: #{znet_forward.1} parent=11 // pred_check
          %p222 = pneg %p148
        $region30: #{znet_forward.1} parent=11 // pred_check_branch
          %224 = sbr.rel (%p222) target = $region32
        $region31: #{znet_forward.1} parent=11 // pred_region
          _
        $region32: #{znet_forward.1} parent=11 // pred_fallthru
          _
        // Predicated region
        $region33: #{znet_forward.1} parent=11 // pred_check
          %p225 = pneg %p169
        $region34: #{znet_forward.1} parent=11 // pred_check_branch
          %227 = sbr.rel (%p225) target = $region36
        $region35: #{znet_forward.1} parent=11 // pred_region
          _
        $region36: #{znet_forward.1} parent=11 // pred_fallthru
          _
      $region12: #{znet_forward.1} parent=5 // pred_fallthru
        _
      %p228 = scmp.lt.s32.totalorder %s17, 2
      // Predicated region
      $region37: #{znet_forward.1} parent=5 // pred_check
        %p229 = pneg %p228
      $region38: #{znet_forward.1} parent=5 // pred_check_branch
        %231 = sbr.rel (%p229) target = $region40
      $region39: #{znet_forward.1} parent=5 // pred_region
        // Predicated region
        $region41: #{znet_forward.1} parent=39 // pred_check
          %p232 = pneg %p37
        $region42: #{znet_forward.1} parent=39 // pred_check_branch
          %234 = sbr.rel (%p232) target = $region44
        $region43: #{znet_forward.1} parent=39 // pred_region
          %s235 = smul.u32 32, %s17
          %s236 = ssub.s32 38, %s235
          %p237 = scmp.lt.s32.totalorder %s236, 32
          %s238 = scalar_select %p237, %s236, 32
          %s239 = smul.u32 128, %s238
          %p240 = scmp.lt.s32.totalorder %s235, 37
          %s241 = scalar_select %p240, %s235, 37
          %s242 = smul.addr %s241, 8
          %s243 = scalar_lea.vmem %s0, %s242
          %s244 = smul.u32 32, %s17
          %s245 = ssub.s32 38, %s244
          %p246 = scmp.lt.s32.totalorder %s245, 32
          %s247 = scalar_select %p246, %s245, 32
          %s248 = smul.u32 128, %s247
        $region44: #{znet_forward.1} parent=39 // pred_fallthru
          _
      $region40: #{znet_forward.1} parent=5 // pred_fallthru
        _
      %p249 = scmp.le.s32.totalorder 1, %s17
      %p250 = scmp.lt.s32.totalorder %s17, 3
      %p251 = pnand %p249, %p250
      %p252 = pneg %p251
      // Predicated region
      $region45: #{znet_forward.1} parent=5 // pred_check
        _
      $region46: #{znet_forward.1} parent=5 // pred_check_branch
        %254 = sbr.rel (%p251) target = $region48
      $region47: #{znet_forward.1} parent=5 // pred_region
        %s255 = ssub.s32 %s17, 1
        %s256 = smul.u32 32, %s22
        %s257 = ssub.s32 38, %s256
        %p258 = scmp.lt.s32.totalorder %s257, 32
        %s259 = scalar_select %p258, %s257, 32
        %s260 = smul.u32 128, %s259
        %p261 = scmp.lt.s32.totalorder %s256, 37
        %s262 = scalar_select %p261, %s256, 37
        %s263 = smul.addr %s262, 8
        %s264 = scalar_lea.vmem %s0, %s263
        %p265 = pneg %p43
        %p266 = pneg %p40
        %p267 = pneg %p64
        %p268 = pneg %p61
        %p269 = pneg %p85
        %p270 = pneg %p82
        %p271 = pneg %p106
        %p272 = pneg %p103
        %p273 = pneg %p127
        %p274 = pneg %p124
        %p275 = pneg %p148
        %p276 = pneg %p145
        %p277 = pneg %p169
        %p278 = pneg %p166
        %p279 = pneg %p195
        %p280 = pneg %p192
        %s281 = sand.u32 %s182, 1
        %s282 = scalar_lea.sflag [#allocation4], %s281
        %s283 = sand.u32 %s182, 1
        %s284 = smul.addr %s283, 2
        %s285 = scalar_lea.vmem [#allocation3], %s284
        %s286 = smul.u32 32, %s22
        %s287 = ssub.s32 38, %s286
        %p288 = scmp.lt.s32.totalorder %s287, 32
        %s289 = scalar_select %p288, %s287, 32
        %s290 = smul.u32 128, %s289
        %p291 = scmp.lt.s32.totalorder %s286, 37
        %s292 = scalar_select %p291, %s286, 37
        %s293 = smul.addr %s292, 8
        %s294 = scalar_lea.vmem %s0, %s293
        %s295 = smul.u32 32, %s22
        %s296 = ssub.s32 38, %s295
        %p297 = scmp.lt.s32.totalorder %s296, 32
        %s298 = scalar_select %p297, %s296, 32
        %s299 = smul.u32 128, %s298
        %s300 = smul.u32 2, %s22
        %s301 = ssub.s32 3, %s300
        %p302 = scmp.lt.s32.totalorder %s301, 2
        %s303 = scalar_select %p302, %s301, 2
        %s304 = smul.u32 16, %s303
        %v305 = vld [vmem:[%s294] sm:$0xff]
        %v306 = vld [vmem:[%s294 + $0x8] sm:$0xff]
        %v307 = vld [vmem:[%s294 + $0x10] sm:$0xff]
        %v308 = vld [vmem:[%s294 + $0x18] sm:$0xff]
        %v309 = vld [vmem:[%s294 + $0x20] sm:$0xff]
        %v310 = vld [vmem:[%s294 + $0x28] sm:$0xff]
        %v311 = vld [vmem:[%s294 + $0x30] sm:$0xff]
        %v312 = vld [vmem:[%s294 + $0x38] sm:$0xff]
        %v313 = vld [vmem:[%s294 + $0x40] sm:$0xff]
        %v314 = vld [vmem:[%s294 + $0x48] sm:$0xff]
        %v315 = vld [vmem:[%s294 + $0x50] sm:$0xff]
        %v316 = vld [vmem:[%s294 + $0x58] sm:$0xff]
        %v317 = vld [vmem:[%s294 + $0x60] sm:$0xff]
        %v318 = vld [vmem:[%s294 + $0x68] sm:$0xff]
        %v319 = vld [vmem:[%s294 + $0x70] sm:$0xff]
        %v320 = vld [vmem:[%s294 + $0x78] sm:$0xff]
        %v321 = vld [vmem:[%s294 + $0x80] sm:$0xff]
        %v322 = vld [vmem:[%s294 + $0x88] sm:$0xff]
        %v323 = vld [vmem:[%s294 + $0x90] sm:$0xff]
        %v324 = vld [vmem:[%s294 + $0x98] sm:$0xff]
        %v325 = vld [vmem:[%s294 + $0xa0] sm:$0xff]
        %v326 = vld [vmem:[%s294 + $0xa8] sm:$0xff]
        %v327 = vld [vmem:[%s294 + $0xb0] sm:$0xff]
        %v328 = vld [vmem:[%s294 + $0xb8] sm:$0xff]
        %v329 = vld [vmem:[%s294 + $0xc0] sm:$0xff]
        %v330 = vld [vmem:[%s294 + $0xc8] sm:$0xff]
        %v331 = vld [vmem:[%s294 + $0xd0] sm:$0xff]
        %v332 = vld [vmem:[%s294 + $0xd8] sm:$0xff]
        %v333 = vld [vmem:[%s294 + $0xe0] sm:$0xff]
        %v334 = vld [vmem:[%s294 + $0xe8] sm:$0xff]
        %v335 = vld [vmem:[%s294 + $0xf0] sm:$0xff]
        %v336 = vld [vmem:[%s294 + $0xf8] sm:$0xff]
        %v337 = vld [vmem:[%s1] sm:$0xff]
        %v338 = vld [vmem:[%s1 + $0x8] sm:$0xff]
        %v339 = vld [vmem:[%s1 + $0x10] sm:$0xff]
        %v340 = vld [vmem:[%s1 + $0x18] sm:$0xff]
        %v341 = vld [vmem:[%s1 + $0x20] sm:$0xff]
        %v342 = vld [vmem:[%s1 + $0x28] sm:$0xff]
        %v343 = vld [vmem:[%s1 + $0x30] sm:$0xff]
        %v344 = vld [vmem:[%s1 + $0x38] sm:$0xff]
        %v345 = vld [vmem:[%s1 + $0x40] sm:$0xff]
        %v346 = vld [vmem:[%s1 + $0x48] sm:$0xff]
        %v347 = vld [vmem:[%s1 + $0x50] sm:$0xff]
        %v348 = vld [vmem:[%s1 + $0x58] sm:$0xff]
        %v349 = vld [vmem:[%s1 + $0x60] sm:$0xff]
        %v350 = vld [vmem:[%s1 + $0x68] sm:$0xff]
        %v351 = vld [vmem:[%s1 + $0x70] sm:$0xff]
        %v352 = vld [vmem:[%s1 + $0x78] sm:$0xff]
        %v353 = vld [vmem:[%s2] sm:$0xff]
        %v354 = vld [vmem:[%s2 + $0x8] sm:$0xff]
        %v355 = vld [vmem:[%s2 + $0x10] sm:$0xff]
        %v356 = vld [vmem:[%s2 + $0x18] sm:$0xff]
        %v357 = vld [vmem:[%s2 + $0x20] sm:$0xff]
        %v358 = vld [vmem:[%s2 + $0x28] sm:$0xff]
        %v359 = vld [vmem:[%s2 + $0x30] sm:$0xff]
        %v360 = vld [vmem:[%s2 + $0x38] sm:$0xff]
        %v361 = vld [vmem:[%s2 + $0x40] sm:$0xff]
        %v362 = vld [vmem:[%s2 + $0x48] sm:$0xff]
        %v363 = vld [vmem:[%s2 + $0x50] sm:$0xff]
        %v364 = vld [vmem:[%s2 + $0x58] sm:$0xff]
        %v365 = vld [vmem:[%s2 + $0x60] sm:$0xff]
        %v366 = vld [vmem:[%s2 + $0x68] sm:$0xff]
        %v367 = vld [vmem:[%s2 + $0x70] sm:$0xff]
        %v368 = vld [vmem:[%s2 + $0x78] sm:$0xff]
        %370 = vset.pattern.permute.xlu0 0
        %371 = vperm.xlu0 %370, %v353
        %v372 = vpop.permute.xlu0 %371
        %375 = vset.pattern.permute.xlu0 0
        %376 = vperm.xlu0 %375, %v354
        %v377 = vpop.permute.xlu0 %376
        %380 = vset.pattern.permute.xlu0 0
        %381 = vperm.xlu0 %380, %v355
        %v382 = vpop.permute.xlu0 %381
        %385 = vset.pattern.permute.xlu0 0
        %386 = vperm.xlu0 %385, %v356
        %v387 = vpop.permute.xlu0 %386
        %390 = vset.pattern.permute.xlu0 0
        %391 = vperm.xlu0 %390, %v357
        %v392 = vpop.permute.xlu0 %391
        %395 = vset.pattern.permute.xlu0 0
        %396 = vperm.xlu0 %395, %v358
        %v397 = vpop.permute.xlu0 %396
        %400 = vset.pattern.permute.xlu0 0
        %401 = vperm.xlu0 %400, %v359
        %v402 = vpop.permute.xlu0 %401
        %405 = vset.pattern.permute.xlu0 0
        %406 = vperm.xlu0 %405, %v360
        %v407 = vpop.permute.xlu0 %406
        %410 = vset.pattern.permute.xlu0 0
        %411 = vperm.xlu0 %410, %v361
        %v412 = vpop.permute.xlu0 %411
        %415 = vset.pattern.permute.xlu0 0
        %416 = vperm.xlu0 %415, %v362
        %v417 = vpop.permute.xlu0 %416
        %420 = vset.pattern.permute.xlu0 0
        %421 = vperm.xlu0 %420, %v363
        %v422 = vpop.permute.xlu0 %421
        %425 = vset.pattern.permute.xlu0 0
        %426 = vperm.xlu0 %425, %v364
        %v427 = vpop.permute.xlu0 %426
        %430 = vset.pattern.permute.xlu0 0
        %431 = vperm.xlu0 %430, %v365
        %v432 = vpop.permute.xlu0 %431
        %435 = vset.pattern.permute.xlu0 0
        %436 = vperm.xlu0 %435, %v366
        %v437 = vpop.permute.xlu0 %436
        %440 = vset.pattern.permute.xlu0 0
        %441 = vperm.xlu0 %440, %v367
        %v442 = vpop.permute.xlu0 %441
        %445 = vset.pattern.permute.xlu0 0
        %446 = vperm.xlu0 %445, %v368
        %v447 = vpop.permute.xlu0 %446
        %vm449 = vcmask 130048
        %v451 = vsel %vm449, %v337, 0
        %v454 = vsel %vm449, %v338, 0
        %v457 = vsel %vm449, %v339, 0
        %v460 = vsel %vm449, %v340, 0
        %v463 = vsel %vm449, %v341, 0
        %v466 = vsel %vm449, %v342, 0
        %v469 = vsel %vm449, %v343, 0
        %v472 = vsel %vm449, %v344, 0
        %v475 = vsel %vm449, %v345, 0
        %v478 = vsel %vm449, %v346, 0
        %v481 = vsel %vm449, %v347, 0
        %v484 = vsel %vm449, %v348, 0
        %v487 = vsel %vm449, %v349, 0
        %v490 = vsel %vm449, %v350, 0
        %v493 = vsel %vm449, %v351, 0
        %v496 = vsel %vm449, %v352, 0
        %v499 = vsel %vm449, %v305, 0
        %v502 = vsel %vm449, %v306, 0
        %v505 = vsel %vm449, %v307, 0
        %v508 = vsel %vm449, %v308, 0
        %v511 = vsel %vm449, %v309, 0
        %v514 = vsel %vm449, %v310, 0
        %v517 = vsel %vm449, %v311, 0
        %v520 = vsel %vm449, %v312, 0
        %v523 = vsel %vm449, %v313, 0
        %v526 = vsel %vm449, %v314, 0
        %v529 = vsel %vm449, %v315, 0
        %v532 = vsel %vm449, %v316, 0
        %v535 = vsel %vm449, %v317, 0
        %v538 = vsel %vm449, %v318, 0
        %v541 = vsel %vm449, %v319, 0
        %v544 = vsel %vm449, %v320, 0
        %v547 = vsel %vm449, %v321, 0
        %v550 = vsel %vm449, %v322, 0
        %v553 = vsel %vm449, %v323, 0
        %v556 = vsel %vm449, %v324, 0
        %v559 = vsel %vm449, %v325, 0
        %v562 = vsel %vm449, %v326, 0
        %v565 = vsel %vm449, %v327, 0
        %v568 = vsel %vm449, %v328, 0
        %v571 = vsel %vm449, %v329, 0
        %v574 = vsel %vm449, %v330, 0
        %v577 = vsel %vm449, %v331, 0
        %v580 = vsel %vm449, %v332, 0
        %v583 = vsel %vm449, %v333, 0
        %v586 = vsel %vm449, %v334, 0
        %v589 = vsel %vm449, %v335, 0
        %v592 = vsel %vm449, %v336, 0
        %594 = vmatprep.subr.mxu0 0.0
        %595 = vmatpush1.xpose.msra.mxu0 %v544
        %596 = vmatprep.subr.mxu0 0.0
        %597 = vmatpush1.xpose.msra.mxu0 %v541
        %598 = vmatprep.subr.mxu0 0.0
        %599 = vmatpush1.xpose.msra.mxu0 %v538
        %600 = vmatprep.subr.mxu0 0.0
        %601 = vmatpush1.xpose.msra.mxu0 %v535
        %602 = vmatprep.subr.mxu0 0.0
        %603 = vmatpush1.xpose.msra.mxu0 %v532
        %604 = vmatprep.subr.mxu0 0.0
        %605 = vmatpush1.xpose.msra.mxu0 %v529
        %606 = vmatprep.subr.mxu0 0.0
        %607 = vmatpush1.xpose.msra.mxu0 %v526
        %608 = vmatprep.subr.mxu0 0.0
        %609 = vmatpush1.xpose.msra.mxu0 %v523
        %610 = vmatprep.subr.mxu0 0.0
        %611 = vmatpush1.xpose.msra.mxu0 %v520
        %612 = vmatprep.subr.mxu0 0.0
        %613 = vmatpush1.xpose.msra.mxu0 %v517
        %614 = vmatprep.subr.mxu0 0.0
        %615 = vmatpush1.xpose.msra.mxu0 %v514
        %616 = vmatprep.subr.mxu0 0.0
        %617 = vmatpush1.xpose.msra.mxu0 %v511
        %618 = vmatprep.subr.mxu0 0.0
        %619 = vmatpush1.xpose.msra.mxu0 %v508
        %620 = vmatprep.subr.mxu0 0.0
        %621 = vmatpush1.xpose.msra.mxu0 %v505
        %622 = vmatprep.subr.mxu0 0.0
        %623 = vmatpush1.xpose.msra.mxu0 %v502
        %624 = vmatprep.subr.mxu0 0.0
        %625 = vmatpush1.xpose.msra.mxu0 %v499
        %626 = vmatprep.subr.mxu0 0.0
        %627 = vmatpush2.xpose.msra.mxu0 %v592
        %628 = vmatprep.subr.mxu0 0.0
        %629 = vmatpush2.xpose.msra.mxu0 %v589
        %630 = vmatprep.subr.mxu0 0.0
        %631 = vmatpush2.xpose.msra.mxu0 %v586
        %632 = vmatprep.subr.mxu0 0.0
        %633 = vmatpush2.xpose.msra.mxu0 %v583
        %634 = vmatprep.subr.mxu0 0.0
        %635 = vmatpush2.xpose.msra.mxu0 %v580
        %636 = vmatprep.subr.mxu0 0.0
        %637 = vmatpush2.xpose.msra.mxu0 %v577
        %638 = vmatprep.subr.mxu0 0.0
        %639 = vmatpush2.xpose.msra.mxu0 %v574
        %640 = vmatprep.subr.mxu0 0.0
        %641 = vmatpush2.xpose.msra.mxu0 %v571
        %642 = vmatprep.subr.mxu0 0.0
        %643 = vmatpush2.xpose.msra.mxu0 %v568
        %644 = vmatprep.subr.mxu0 0.0
        %645 = vmatpush2.xpose.msra.mxu0 %v565
        %646 = vmatprep.subr.mxu0 0.0
        %647 = vmatpush2.xpose.msra.mxu0 %v562
        %648 = vmatprep.subr.mxu0 0.0
        %649 = vmatpush2.xpose.msra.mxu0 %v559
        %650 = vmatprep.subr.mxu0 0.0
        %651 = vmatpush2.xpose.msra.mxu0 %v556
        %652 = vmatprep.subr.mxu0 0.0
        %653 = vmatpush2.xpose.msra.mxu0 %v553
        %654 = vmatprep.subr.mxu0 0.0
        %655 = vmatpush2.xpose.msra.mxu0 %v550
        %656 = vmatprep.subr.mxu0 0.0
        %657 = vmatpush2.xpose.msra.mxu0 %v547
        %658 = vmatprep.mubr.f32.mxu0 0.0
        %659 = vmatmul.mubr.f32.gmra.mxu0 %v451
        %v660 = vpop.f32.mrf.mxu0
        %v661 = vadd.f32 %v372, %v660
        %v662 = vpop.f32.mrf.mxu0
        %v663 = vadd.f32 %v372, %v662
        %664 = vmatprep.mubr.f32.mxu0 0.0
        %665 = vmatmul.mubr.f32.gmra.mxu0 %v454
        %v666 = vpop.f32.mrf.mxu0
        %v667 = vadd.f32 %v377, %v666
        %v668 = vpop.f32.mrf.mxu0
        %v669 = vadd.f32 %v377, %v668
        %670 = vmatprep.mubr.f32.mxu0 0.0
        %671 = vmatmul.mubr.f32.gmra.mxu0 %v457
        %v672 = vpop.f32.mrf.mxu0
        %v673 = vadd.f32 %v382, %v672
        %v674 = vpop.f32.mrf.mxu0
        %v675 = vadd.f32 %v382, %v674
        %676 = vmatprep.mubr.f32.mxu0 0.0
        %677 = vmatmul.mubr.f32.gmra.mxu0 %v460
        %v678 = vpop.f32.mrf.mxu0
        %v679 = vadd.f32 %v387, %v678
        %v680 = vpop.f32.mrf.mxu0
        %v681 = vadd.f32 %v387, %v680
        %682 = vmatprep.mubr.f32.mxu0 0.0
        %683 = vmatmul.mubr.f32.gmra.mxu0 %v463
        %v684 = vpop.f32.mrf.mxu0
        %v685 = vadd.f32 %v392, %v684
        %v686 = vpop.f32.mrf.mxu0
        %v687 = vadd.f32 %v392, %v686
        %688 = vmatprep.mubr.f32.mxu0 0.0
        %689 = vmatmul.mubr.f32.gmra.mxu0 %v466
        %v690 = vpop.f32.mrf.mxu0
        %v691 = vadd.f32 %v397, %v690
        %v692 = vpop.f32.mrf.mxu0
        %v693 = vadd.f32 %v397, %v692
        %694 = vmatprep.mubr.f32.mxu0 0.0
        %695 = vmatmul.mubr.f32.gmra.mxu0 %v469
        %v696 = vpop.f32.mrf.mxu0
        %v697 = vadd.f32 %v402, %v696
        %v698 = vpop.f32.mrf.mxu0
        %v699 = vadd.f32 %v402, %v698
        %700 = vmatprep.mubr.f32.mxu0 0.0
        %701 = vmatmul.mubr.f32.gmra.mxu0 %v472
        %v702 = vpop.f32.mrf.mxu0
        %v703 = vadd.f32 %v407, %v702
        %v704 = vpop.f32.mrf.mxu0
        %v705 = vadd.f32 %v407, %v704
        %706 = vmatprep.mubr.f32.mxu0 0.0
        %707 = vmatmul.mubr.f32.gmra.mxu0 %v475
        %v708 = vpop.f32.mrf.mxu0
        %v709 = vadd.f32 %v412, %v708
        %v710 = vpop.f32.mrf.mxu0
        %v711 = vadd.f32 %v412, %v710
        %712 = vmatprep.mubr.f32.mxu0 0.0
        %713 = vmatmul.mubr.f32.gmra.mxu0 %v478
        %v714 = vpop.f32.mrf.mxu0
        %v715 = vadd.f32 %v417, %v714
        %v716 = vpop.f32.mrf.mxu0
        %v717 = vadd.f32 %v417, %v716
        %718 = vmatprep.mubr.f32.mxu0 0.0
        %719 = vmatmul.mubr.f32.gmra.mxu0 %v481
        %v720 = vpop.f32.mrf.mxu0
        %v721 = vadd.f32 %v422, %v720
        %v722 = vpop.f32.mrf.mxu0
        %v723 = vadd.f32 %v422, %v722
        %724 = vmatprep.mubr.f32.mxu0 0.0
        %725 = vmatmul.mubr.f32.gmra.mxu0 %v484
        %v726 = vpop.f32.mrf.mxu0
        %v727 = vadd.f32 %v427, %v726
        %v728 = vpop.f32.mrf.mxu0
        %v729 = vadd.f32 %v427, %v728
        %730 = vmatprep.mubr.f32.mxu0 0.0
        %731 = vmatmul.mubr.f32.gmra.mxu0 %v487
        %v732 = vpop.f32.mrf.mxu0
        %v733 = vadd.f32 %v432, %v732
        %v734 = vpop.f32.mrf.mxu0
        %v735 = vadd.f32 %v432, %v734
        %736 = vmatprep.mubr.f32.mxu0 0.0
        %737 = vmatmul.mubr.f32.gmra.mxu0 %v490
        %v738 = vpop.f32.mrf.mxu0
        %v739 = vadd.f32 %v437, %v738
        %v740 = vpop.f32.mrf.mxu0
        %v741 = vadd.f32 %v437, %v740
        %742 = vmatprep.mubr.f32.mxu0 0.0
        %743 = vmatmul.mubr.f32.gmra.mxu0 %v493
        %v744 = vpop.f32.mrf.mxu0
        %v745 = vadd.f32 %v442, %v744
        %v746 = vpop.f32.mrf.mxu0
        %v747 = vadd.f32 %v442, %v746
        %748 = vmatprep.mubr.f32.mxu0 0.0
        %749 = vmatmul.mubr.f32.gmra.mxu0 %v496
        %v750 = vpop.f32.mrf.mxu0
        %v751 = vadd.f32 %v447, %v750
        %v752 = vpop.f32.mrf.mxu0
        %v753 = vadd.f32 %v447, %v752
        %754 = vdwg.mxu0
        %v755 = vmul.f32 %v661, 0.1
        %v756 = vmul.f32 %v663, 0.1
        %v757 = vmul.f32 %v667, 0.1
        %v758 = vmul.f32 %v669, 0.1
        %v759 = vmul.f32 %v673, 0.1
        %v760 = vmul.f32 %v675, 0.1
        %v761 = vmul.f32 %v679, 0.1
        %v762 = vmul.f32 %v681, 0.1
        %v763 = vmul.f32 %v685, 0.1
        %v764 = vmul.f32 %v687, 0.1
        %v765 = vmul.f32 %v691, 0.1
        %v766 = vmul.f32 %v693, 0.1
        %v767 = vmul.f32 %v697, 0.1
        %v768 = vmul.f32 %v699, 0.1
        %v769 = vmul.f32 %v703, 0.1
        %v770 = vmul.f32 %v705, 0.1
        %v771 = vmul.f32 %v709, 0.1
        %v772 = vmul.f32 %v711, 0.1
        %v773 = vmul.f32 %v715, 0.1
        %v774 = vmul.f32 %v717, 0.1
        %v775 = vmul.f32 %v721, 0.1
        %v776 = vmul.f32 %v723, 0.1
        %v777 = vmul.f32 %v727, 0.1
        %v778 = vmul.f32 %v729, 0.1
        %v779 = vmul.f32 %v733, 0.1
        %v780 = vmul.f32 %v735, 0.1
        %v781 = vmul.f32 %v739, 0.1
        %v782 = vmul.f32 %v741, 0.1
        %v783 = vmul.f32 %v745, 0.1
        %v784 = vmul.f32 %v747, 0.1
        %v785 = vmul.f32 %v751, 0.1
        %v786 = vmul.f32 %v753, 0.1
        %v787 = vmax.f32 %v661, %v755
        %v788 = vmax.f32 %v663, %v756
        %v789 = vmax.f32 %v667, %v757
        %v790 = vmax.f32 %v669, %v758
        %v791 = vmax.f32 %v673, %v759
        %v792 = vmax.f32 %v675, %v760
        %v793 = vmax.f32 %v679, %v761
        %v794 = vmax.f32 %v681, %v762
        %v795 = vmax.f32 %v685, %v763
        %v796 = vmax.f32 %v687, %v764
        %v797 = vmax.f32 %v691, %v765
        %v798 = vmax.f32 %v693, %v766
        %v799 = vmax.f32 %v697, %v767
        %v800 = vmax.f32 %v699, %v768
        %v801 = vmax.f32 %v703, %v769
        %v802 = vmax.f32 %v705, %v770
        %v803 = vmax.f32 %v709, %v771
        %v804 = vmax.f32 %v711, %v772
        %v805 = vmax.f32 %v715, %v773
        %v806 = vmax.f32 %v717, %v774
        %v807 = vmax.f32 %v721, %v775
        %v808 = vmax.f32 %v723, %v776
        %v809 = vmax.f32 %v727, %v777
        %v810 = vmax.f32 %v729, %v778
        %v811 = vmax.f32 %v733, %v779
        %v812 = vmax.f32 %v735, %v780
        %v813 = vmax.f32 %v739, %v781
        %v814 = vmax.f32 %v741, %v782
        %v815 = vmax.f32 %v745, %v783
        %v816 = vmax.f32 %v747, %v784
        %v817 = vmax.f32 %v751, %v785
        %v818 = vmax.f32 %v753, %v786
        %v819 = vld [vmem:[%s3] sm:$0xff]
        %v820 = vld [vmem:[%s3 + $0x8] sm:$0xff]
        %v821 = vld [vmem:[%s3 + $0x10] sm:$0xff]
        %v822 = vld [vmem:[%s3 + $0x18] sm:$0xff]
        %v823 = vld [vmem:[%s3 + $0x20] sm:$0xff]
        %v824 = vld [vmem:[%s3 + $0x28] sm:$0xff]
        %v825 = vld [vmem:[%s3 + $0x30] sm:$0xff]
        %v826 = vld [vmem:[%s3 + $0x38] sm:$0xff]
        %v827 = vld [vmem:[%s3 + $0x40] sm:$0xff]
        %v828 = vld [vmem:[%s3 + $0x48] sm:$0xff]
        %v829 = vld [vmem:[%s3 + $0x50] sm:$0xff]
        %v830 = vld [vmem:[%s3 + $0x58] sm:$0xff]
        %v831 = vld [vmem:[%s3 + $0x60] sm:$0xff]
        %v832 = vld [vmem:[%s3 + $0x68] sm:$0xff]
        %v833 = vld [vmem:[%s3 + $0x70] sm:$0xff]
        %v834 = vld [vmem:[%s3 + $0x78] sm:$0xff]
        %v835 = vld [vmem:[%s4] sm:$0xff]
        %v836 = vld [vmem:[%s4 + $0x8] sm:$0xff]
        %v837 = vld [vmem:[%s4 + $0x10] sm:$0xff]
        %v838 = vld [vmem:[%s4 + $0x18] sm:$0xff]
        %v839 = vld [vmem:[%s4 + $0x20] sm:$0xff]
        %v840 = vld [vmem:[%s4 + $0x28] sm:$0xff]
        %v841 = vld [vmem:[%s4 + $0x30] sm:$0xff]
        %v842 = vld [vmem:[%s4 + $0x38] sm:$0xff]
        %v843 = vld [vmem:[%s4 + $0x40] sm:$0xff]
        %v844 = vld [vmem:[%s4 + $0x48] sm:$0xff]
        %v845 = vld [vmem:[%s4 + $0x50] sm:$0xff]
        %v846 = vld [vmem:[%s4 + $0x58] sm:$0xff]
        %v847 = vld [vmem:[%s4 + $0x60] sm:$0xff]
        %v848 = vld [vmem:[%s4 + $0x68] sm:$0xff]
        %v849 = vld [vmem:[%s4 + $0x70] sm:$0xff]
        %v850 = vld [vmem:[%s4 + $0x78] sm:$0xff]
        %852 = vset.pattern.permute.xlu0 0
        %853 = vperm.xlu0 %852, %v835
        %v854 = vpop.permute.xlu0 %853
        %857 = vset.pattern.permute.xlu0 0
        %858 = vperm.xlu0 %857, %v836
        %v859 = vpop.permute.xlu0 %858
        %862 = vset.pattern.permute.xlu0 0
        %863 = vperm.xlu0 %862, %v837
        %v864 = vpop.permute.xlu0 %863
        %867 = vset.pattern.permute.xlu0 0
        %868 = vperm.xlu0 %867, %v838
        %v869 = vpop.permute.xlu0 %868
        %872 = vset.pattern.permute.xlu0 0
        %873 = vperm.xlu0 %872, %v839
        %v874 = vpop.permute.xlu0 %873
        %877 = vset.pattern.permute.xlu0 0
        %878 = vperm.xlu0 %877, %v840
        %v879 = vpop.permute.xlu0 %878
        %882 = vset.pattern.permute.xlu0 0
        %883 = vperm.xlu0 %882, %v841
        %v884 = vpop.permute.xlu0 %883
        %887 = vset.pattern.permute.xlu0 0
        %888 = vperm.xlu0 %887, %v842
        %v889 = vpop.permute.xlu0 %888
        %892 = vset.pattern.permute.xlu0 0
        %893 = vperm.xlu0 %892, %v843
        %v894 = vpop.permute.xlu0 %893
        %897 = vset.pattern.permute.xlu0 0
        %898 = vperm.xlu0 %897, %v844
        %v899 = vpop.permute.xlu0 %898
        %902 = vset.pattern.permute.xlu0 0
        %903 = vperm.xlu0 %902, %v845
        %v904 = vpop.permute.xlu0 %903
        %907 = vset.pattern.permute.xlu0 0
        %908 = vperm.xlu0 %907, %v846
        %v909 = vpop.permute.xlu0 %908
        %912 = vset.pattern.permute.xlu0 0
        %913 = vperm.xlu0 %912, %v847
        %v914 = vpop.permute.xlu0 %913
        %917 = vset.pattern.permute.xlu0 0
        %918 = vperm.xlu0 %917, %v848
        %v919 = vpop.permute.xlu0 %918
        %922 = vset.pattern.permute.xlu0 0
        %923 = vperm.xlu0 %922, %v849
        %v924 = vpop.permute.xlu0 %923
        %927 = vset.pattern.permute.xlu0 0
        %928 = vperm.xlu0 %927, %v850
        %v929 = vpop.permute.xlu0 %928
        %931 = vmatprep.subr.mxu0 %v818
        %932 = vmatpush1.msra.mxu0 %v817
        %933 = vmatprep.subr.mxu0 %v816
        %934 = vmatpush1.msra.mxu0 %v815
        %935 = vmatprep.subr.mxu0 %v814
        %936 = vmatpush1.msra.mxu0 %v813
        %937 = vmatprep.subr.mxu0 %v812
        %938 = vmatpush1.msra.mxu0 %v811
        %939 = vmatprep.subr.mxu0 %v810
        %940 = vmatpush1.msra.mxu0 %v809
        %941 = vmatprep.subr.mxu0 %v808
        %942 = vmatpush1.msra.mxu0 %v807
        %943 = vmatprep.subr.mxu0 %v806
        %944 = vmatpush1.msra.mxu0 %v805
        %945 = vmatprep.subr.mxu0 %v804
        %946 = vmatpush1.msra.mxu0 %v803
        %947 = vmatprep.subr.mxu0 %v802
        %948 = vmatpush1.msra.mxu0 %v801
        %949 = vmatprep.subr.mxu0 %v800
        %950 = vmatpush1.msra.mxu0 %v799
        %951 = vmatprep.subr.mxu0 %v798
        %952 = vmatpush1.msra.mxu0 %v797
        %953 = vmatprep.subr.mxu0 %v796
        %954 = vmatpush1.msra.mxu0 %v795
        %955 = vmatprep.subr.mxu0 %v794
        %956 = vmatpush1.msra.mxu0 %v793
        %957 = vmatprep.subr.mxu0 %v792
        %958 = vmatpush1.msra.mxu0 %v791
        %959 = vmatprep.subr.mxu0 %v790
        %960 = vmatpush1.msra.mxu0 %v789
        %961 = vmatprep.subr.mxu0 %v788
        %962 = vmatpush1.msra.mxu0 %v787
        %963 = vmatprep.subr.mxu0 0.0
        %964 = vmatpush2.msra.mxu0 0.0
        %965 = vmatprep.subr.mxu0 0.0
        %966 = vmatpush2.msra.mxu0 0.0
        %967 = vmatprep.subr.mxu0 0.0
        %968 = vmatpush2.msra.mxu0 0.0
        %969 = vmatprep.subr.mxu0 0.0
        %970 = vmatpush2.msra.mxu0 0.0
        %971 = vmatprep.subr.mxu0 0.0
        %972 = vmatpush2.msra.mxu0 0.0
        %973 = vmatprep.subr.mxu0 0.0
        %974 = vmatpush2.msra.mxu0 0.0
        %975 = vmatprep.subr.mxu0 0.0
        %976 = vmatpush2.msra.mxu0 0.0
        %977 = vmatprep.subr.mxu0 0.0
        %978 = vmatpush2.msra.mxu0 0.0
        %979 = vmatprep.subr.mxu0 0.0
        %980 = vmatpush2.msra.mxu0 0.0
        %981 = vmatprep.subr.mxu0 0.0
        %982 = vmatpush2.msra.mxu0 0.0
        %983 = vmatprep.subr.mxu0 0.0
        %984 = vmatpush2.msra.mxu0 0.0
        %985 = vmatprep.subr.mxu0 0.0
        %986 = vmatpush2.msra.mxu0 0.0
        %987 = vmatprep.subr.mxu0 0.0
        %988 = vmatpush2.msra.mxu0 0.0
        %989 = vmatprep.subr.mxu0 0.0
        %990 = vmatpush2.msra.mxu0 0.0
        %991 = vmatprep.subr.mxu0 0.0
        %992 = vmatpush2.msra.mxu0 0.0
        %993 = vmatprep.subr.mxu0 0.0
        %994 = vmatpush2.msra.mxu0 0.0
        %995 = vmatprep.mubr.f32.mxu0 0.0
        %996 = vmatmul.mubr.f32.gmra.mxu0 %v819
        %v997 = vpop.f32.mrf.mxu0
        %v998 = vadd.f32 %v854, %v997
        %v999 = vpop.f32.mrf.mxu0
        %v1000 = vadd.f32 %v854, %v999
        %1001 = vmatprep.mubr.f32.mxu0 0.0
        %1002 = vmatmul.mubr.f32.gmra.mxu0 %v820
        %v1003 = vpop.f32.mrf.mxu0
        %v1004 = vadd.f32 %v859, %v1003
        %v1005 = vpop.f32.mrf.mxu0
        %v1006 = vadd.f32 %v859, %v1005
        %1007 = vmatprep.mubr.f32.mxu0 0.0
        %1008 = vmatmul.mubr.f32.gmra.mxu0 %v821
        %v1009 = vpop.f32.mrf.mxu0
        %v1010 = vadd.f32 %v864, %v1009
        %v1011 = vpop.f32.mrf.mxu0
        %v1012 = vadd.f32 %v864, %v1011
        %1013 = vmatprep.mubr.f32.mxu0 0.0
        %1014 = vmatmul.mubr.f32.gmra.mxu0 %v822
        %v1015 = vpop.f32.mrf.mxu0
        %v1016 = vadd.f32 %v869, %v1015
        %v1017 = vpop.f32.mrf.mxu0
        %v1018 = vadd.f32 %v869, %v1017
        %1019 = vmatprep.mubr.f32.mxu0 0.0
        %1020 = vmatmul.mubr.f32.gmra.mxu0 %v823
        %v1021 = vpop.f32.mrf.mxu0
        %v1022 = vadd.f32 %v874, %v1021
        %v1023 = vpop.f32.mrf.mxu0
        %v1024 = vadd.f32 %v874, %v1023
        %1025 = vmatprep.mubr.f32.mxu0 0.0
        %1026 = vmatmul.mubr.f32.gmra.mxu0 %v824
        %v1027 = vpop.f32.mrf.mxu0
        %v1028 = vadd.f32 %v879, %v1027
        %v1029 = vpop.f32.mrf.mxu0
        %v1030 = vadd.f32 %v879, %v1029
        %1031 = vmatprep.mubr.f32.mxu0 0.0
        %1032 = vmatmul.mubr.f32.gmra.mxu0 %v825
        %v1033 = vpop.f32.mrf.mxu0
        %v1034 = vadd.f32 %v884, %v1033
        %v1035 = vpop.f32.mrf.mxu0
        %v1036 = vadd.f32 %v884, %v1035
        %1037 = vmatprep.mubr.f32.mxu0 0.0
        %1038 = vmatmul.mubr.f32.gmra.mxu0 %v826
        %v1039 = vpop.f32.mrf.mxu0
        %v1040 = vadd.f32 %v889, %v1039
        %v1041 = vpop.f32.mrf.mxu0
        %v1042 = vadd.f32 %v889, %v1041
        %1043 = vmatprep.mubr.f32.mxu0 0.0
        %1044 = vmatmul.mubr.f32.gmra.mxu0 %v827
        %v1045 = vpop.f32.mrf.mxu0
        %v1046 = vadd.f32 %v894, %v1045
        %v1047 = vpop.f32.mrf.mxu0
        %v1048 = vadd.f32 %v894, %v1047
        %1049 = vmatprep.mubr.f32.mxu0 0.0
        %1050 = vmatmul.mubr.f32.gmra.mxu0 %v828
        %v1051 = vpop.f32.mrf.mxu0
        %v1052 = vadd.f32 %v899, %v1051
        %v1053 = vpop.f32.mrf.mxu0
        %v1054 = vadd.f32 %v899, %v1053
        %1055 = vmatprep.mubr.f32.mxu0 0.0
        %1056 = vmatmul.mubr.f32.gmra.mxu0 %v829
        %v1057 = vpop.f32.mrf.mxu0
        %v1058 = vadd.f32 %v904, %v1057
        %v1059 = vpop.f32.mrf.mxu0
        %v1060 = vadd.f32 %v904, %v1059
        %1061 = vmatprep.mubr.f32.mxu0 0.0
        %1062 = vmatmul.mubr.f32.gmra.mxu0 %v830
        %v1063 = vpop.f32.mrf.mxu0
        %v1064 = vadd.f32 %v909, %v1063
        %v1065 = vpop.f32.mrf.mxu0
        %v1066 = vadd.f32 %v909, %v1065
        %1067 = vmatprep.mubr.f32.mxu0 0.0
        %1068 = vmatmul.mubr.f32.gmra.mxu0 %v831
        %v1069 = vpop.f32.mrf.mxu0
        %v1070 = vadd.f32 %v914, %v1069
        %v1071 = vpop.f32.mrf.mxu0
        %v1072 = vadd.f32 %v914, %v1071
        %1073 = vmatprep.mubr.f32.mxu0 0.0
        %1074 = vmatmul.mubr.f32.gmra.mxu0 %v832
        %v1075 = vpop.f32.mrf.mxu0
        %v1076 = vadd.f32 %v919, %v1075
        %v1077 = vpop.f32.mrf.mxu0
        %v1078 = vadd.f32 %v919, %v1077
        %1079 = vmatprep.mubr.f32.mxu0 0.0
        %1080 = vmatmul.mubr.f32.gmra.mxu0 %v833
        %v1081 = vpop.f32.mrf.mxu0
        %v1082 = vadd.f32 %v924, %v1081
        %v1083 = vpop.f32.mrf.mxu0
        %v1084 = vadd.f32 %v924, %v1083
        %1085 = vmatprep.mubr.f32.mxu0 0.0
        %1086 = vmatmul.mubr.f32.gmra.mxu0 %v834
        %v1087 = vpop.f32.mrf.mxu0
        %v1088 = vadd.f32 %v929, %v1087
        %v1089 = vpop.f32.mrf.mxu0
        %v1090 = vadd.f32 %v929, %v1089
        %1091 = vdwg.mxu0
        %v1092 = vmul.f32 %v998, 0.1
        %v1093 = vmul.f32 %v1000, 0.1
        %v1094 = vmul.f32 %v1004, 0.1
        %v1095 = vmul.f32 %v1006, 0.1
        %v1096 = vmul.f32 %v1010, 0.1
        %v1097 = vmul.f32 %v1012, 0.1
        %v1098 = vmul.f32 %v1016, 0.1
        %v1099 = vmul.f32 %v1018, 0.1
        %v1100 = vmul.f32 %v1022, 0.1
        %v1101 = vmul.f32 %v1024, 0.1
        %v1102 = vmul.f32 %v1028, 0.1
        %v1103 = vmul.f32 %v1030, 0.1
        %v1104 = vmul.f32 %v1034, 0.1
        %v1105 = vmul.f32 %v1036, 0.1
        %v1106 = vmul.f32 %v1040, 0.1
        %v1107 = vmul.f32 %v1042, 0.1
        %v1108 = vmul.f32 %v1046, 0.1
        %v1109 = vmul.f32 %v1048, 0.1
        %v1110 = vmul.f32 %v1052, 0.1
        %v1111 = vmul.f32 %v1054, 0.1
        %v1112 = vmul.f32 %v1058, 0.1
        %v1113 = vmul.f32 %v1060, 0.1
        %v1114 = vmul.f32 %v1064, 0.1
        %v1115 = vmul.f32 %v1066, 0.1
        %v1116 = vmul.f32 %v1070, 0.1
        %v1117 = vmul.f32 %v1072, 0.1
        %v1118 = vmul.f32 %v1076, 0.1
        %v1119 = vmul.f32 %v1078, 0.1
        %v1120 = vmul.f32 %v1082, 0.1
        %v1121 = vmul.f32 %v1084, 0.1
        %v1122 = vmul.f32 %v1088, 0.1
        %v1123 = vmul.f32 %v1090, 0.1
        %v1124 = vmax.f32 %v998, %v1092
        %v1125 = vmax.f32 %v1000, %v1093
        %v1126 = vmax.f32 %v1004, %v1094
        %v1127 = vmax.f32 %v1006, %v1095
        %v1128 = vmax.f32 %v1010, %v1096
        %v1129 = vmax.f32 %v1012, %v1097
        %v1130 = vmax.f32 %v1016, %v1098
        %v1131 = vmax.f32 %v1018, %v1099
        %v1132 = vmax.f32 %v1022, %v1100
        %v1133 = vmax.f32 %v1024, %v1101
        %v1134 = vmax.f32 %v1028, %v1102
        %v1135 = vmax.f32 %v1030, %v1103
        %v1136 = vmax.f32 %v1034, %v1104
        %v1137 = vmax.f32 %v1036, %v1105
        %v1138 = vmax.f32 %v1040, %v1106
        %v1139 = vmax.f32 %v1042, %v1107
        %v1140 = vmax.f32 %v1046, %v1108
        %v1141 = vmax.f32 %v1048, %v1109
        %v1142 = vmax.f32 %v1052, %v1110
        %v1143 = vmax.f32 %v1054, %v1111
        %v1144 = vmax.f32 %v1058, %v1112
        %v1145 = vmax.f32 %v1060, %v1113
        %v1146 = vmax.f32 %v1064, %v1114
        %v1147 = vmax.f32 %v1066, %v1115
        %v1148 = vmax.f32 %v1070, %v1116
        %v1149 = vmax.f32 %v1072, %v1117
        %v1150 = vmax.f32 %v1076, %v1118
        %v1151 = vmax.f32 %v1078, %v1119
        %v1152 = vmax.f32 %v1082, %v1120
        %v1153 = vmax.f32 %v1084, %v1121
        %v1154 = vmax.f32 %v1088, %v1122
        %v1155 = vmax.f32 %v1090, %v1123
        %v1156 = vld [vmem:[%s5] sm:$0xff]
        %v1157 = vld [vmem:[%s5 + $0x8] sm:$0xff]
        %v1158 = vld [vmem:[%s5 + $0x10] sm:$0xff]
        %v1159 = vld [vmem:[%s5 + $0x18] sm:$0xff]
        %v1160 = vld [vmem:[%s5 + $0x20] sm:$0xff]
        %v1161 = vld [vmem:[%s5 + $0x28] sm:$0xff]
        %v1162 = vld [vmem:[%s5 + $0x30] sm:$0xff]
        %v1163 = vld [vmem:[%s5 + $0x38] sm:$0xff]
        %v1164 = vld [vmem:[%s5 + $0x40] sm:$0xff]
        %v1165 = vld [vmem:[%s5 + $0x48] sm:$0xff]
        %v1166 = vld [vmem:[%s5 + $0x50] sm:$0xff]
        %v1167 = vld [vmem:[%s5 + $0x58] sm:$0xff]
        %v1168 = vld [vmem:[%s5 + $0x60] sm:$0xff]
        %v1169 = vld [vmem:[%s5 + $0x68] sm:$0xff]
        %v1170 = vld [vmem:[%s5 + $0x70] sm:$0xff]
        %v1171 = vld [vmem:[%s5 + $0x78] sm:$0xff]
        %1173 = vset.pattern.permute.xlu0 0
        %1174 = vperm.xlu0 %1173, %v1156
        %v1175 = vpop.permute.xlu0 %1174
        %1178 = vset.pattern.permute.xlu0 0
        %1179 = vperm.xlu0 %1178, %v1157
        %v1180 = vpop.permute.xlu0 %1179
        %1183 = vset.pattern.permute.xlu0 0
        %1184 = vperm.xlu0 %1183, %v1158
        %v1185 = vpop.permute.xlu0 %1184
        %1188 = vset.pattern.permute.xlu0 0
        %1189 = vperm.xlu0 %1188, %v1159
        %v1190 = vpop.permute.xlu0 %1189
        %1193 = vset.pattern.permute.xlu0 0
        %1194 = vperm.xlu0 %1193, %v1160
        %v1195 = vpop.permute.xlu0 %1194
        %1198 = vset.pattern.permute.xlu0 0
        %1199 = vperm.xlu0 %1198, %v1161
        %v1200 = vpop.permute.xlu0 %1199
        %1203 = vset.pattern.permute.xlu0 0
        %1204 = vperm.xlu0 %1203, %v1162
        %v1205 = vpop.permute.xlu0 %1204
        %1208 = vset.pattern.permute.xlu0 0
        %1209 = vperm.xlu0 %1208, %v1163
        %v1210 = vpop.permute.xlu0 %1209
        %1213 = vset.pattern.permute.xlu0 0
        %1214 = vperm.xlu0 %1213, %v1164
        %v1215 = vpop.permute.xlu0 %1214
        %1218 = vset.pattern.permute.xlu0 0
        %1219 = vperm.xlu0 %1218, %v1165
        %v1220 = vpop.permute.xlu0 %1219
        %1223 = vset.pattern.permute.xlu0 0
        %1224 = vperm.xlu0 %1223, %v1166
        %v1225 = vpop.permute.xlu0 %1224
        %1228 = vset.pattern.permute.xlu0 0
        %1229 = vperm.xlu0 %1228, %v1167
        %v1230 = vpop.permute.xlu0 %1229
        %1233 = vset.pattern.permute.xlu0 0
        %1234 = vperm.xlu0 %1233, %v1168
        %v1235 = vpop.permute.xlu0 %1234
        %1238 = vset.pattern.permute.xlu0 0
        %1239 = vperm.xlu0 %1238, %v1169
        %v1240 = vpop.permute.xlu0 %1239
        %1243 = vset.pattern.permute.xlu0 0
        %1244 = vperm.xlu0 %1243, %v1170
        %v1245 = vpop.permute.xlu0 %1244
        %1248 = vset.pattern.permute.xlu0 0
        %1249 = vperm.xlu0 %1248, %v1171
        %v1250 = vpop.permute.xlu0 %1249
        %v1252 = vmul.f32 %v1175, %v1124
        %v1253 = vmul.f32 %v1175, %v1125
        %v1254 = vmul.f32 %v1180, %v1126
        %v1255 = vmul.f32 %v1180, %v1127
        %v1256 = vmul.f32 %v1185, %v1128
        %v1257 = vmul.f32 %v1185, %v1129
        %v1258 = vmul.f32 %v1190, %v1130
        %v1259 = vmul.f32 %v1190, %v1131
        %v1260 = vmul.f32 %v1195, %v1132
        %v1261 = vmul.f32 %v1195, %v1133
        %v1262 = vmul.f32 %v1200, %v1134
        %v1263 = vmul.f32 %v1200, %v1135
        %v1264 = vmul.f32 %v1205, %v1136
        %v1265 = vmul.f32 %v1205, %v1137
        %v1266 = vmul.f32 %v1210, %v1138
        %v1267 = vmul.f32 %v1210, %v1139
        %v1268 = vmul.f32 %v1215, %v1140
        %v1269 = vmul.f32 %v1215, %v1141
        %v1270 = vmul.f32 %v1220, %v1142
        %v1271 = vmul.f32 %v1220, %v1143
        %v1272 = vmul.f32 %v1225, %v1144
        %v1273 = vmul.f32 %v1225, %v1145
        %v1274 = vmul.f32 %v1230, %v1146
        %v1275 = vmul.f32 %v1230, %v1147
        %v1276 = vmul.f32 %v1235, %v1148
        %v1277 = vmul.f32 %v1235, %v1149
        %v1278 = vmul.f32 %v1240, %v1150
        %v1279 = vmul.f32 %v1240, %v1151
        %v1280 = vmul.f32 %v1245, %v1152
        %v1281 = vmul.f32 %v1245, %v1153
        %v1282 = vmul.f32 %v1250, %v1154
        %v1283 = vmul.f32 %v1250, %v1155
        %v1284 = vadd.f32 %v1252, %v1254
        %v1285 = vadd.f32 %v1284, %v1256
        %v1286 = vadd.f32 %v1285, %v1258
        %v1287 = vadd.f32 %v1286, %v1260
        %v1288 = vadd.f32 %v1287, %v1262
        %v1289 = vadd.f32 %v1288, %v1264
        %v1290 = vadd.f32 %v1289, %v1266
        %v1291 = vadd.f32 %v1290, %v1268
        %v1292 = vadd.f32 %v1291, %v1270
        %v1293 = vadd.f32 %v1292, %v1272
        %v1294 = vadd.f32 %v1293, %v1274
        %v1295 = vadd.f32 %v1294, %v1276
        %v1296 = vadd.f32 %v1295, %v1278
        %v1297 = vadd.f32 %v1296, %v1280
        %v1298 = vadd.f32 %v1297, %v1282
        %v1299 = vrot.slane %v1298, 4
        %v1300 = vadd.f32 %v1298, %v1299
        %v1301 = vrot.slane %v1300, 2
        %v1302 = vadd.f32 %v1300, %v1301
        %v1303 = vrot.slane %v1302, 1
        %v1304 = vadd.f32 %v1302, %v1303
        %v1305 = vadd.f32 %v1253, %v1255
        %v1306 = vadd.f32 %v1305, %v1257
        %v1307 = vadd.f32 %v1306, %v1259
        %v1308 = vadd.f32 %v1307, %v1261
        %v1309 = vadd.f32 %v1308, %v1263
        %v1310 = vadd.f32 %v1309, %v1265
        %v1311 = vadd.f32 %v1310, %v1267
        %v1312 = vadd.f32 %v1311, %v1269
        %v1313 = vadd.f32 %v1312, %v1271
        %v1314 = vadd.f32 %v1313, %v1273
        %v1315 = vadd.f32 %v1314, %v1275
        %v1316 = vadd.f32 %v1315, %v1277
        %v1317 = vadd.f32 %v1316, %v1279
        %v1318 = vadd.f32 %v1317, %v1281
        %v1319 = vadd.f32 %v1318, %v1283
        %v1320 = vrot.slane %v1319, 4
        %v1321 = vadd.f32 %v1319, %v1320
        %v1322 = vrot.slane %v1321, 2
        %v1323 = vadd.f32 %v1321, %v1322
        %v1324 = vrot.slane %v1323, 1
        %v1325 = vadd.f32 %v1323, %v1324
        %s1326 = sld [smem:[#allocation2]]
        %v1327 = vstv %s1326
        %v1328 = vadd.f32 %v1304, %v1327
        %v1329 = vadd.f32 %v1325, %v1327
        %v1332 = vcombine.low %v1328, %v1329
        %v1334 = vunpack.c.l.s4 1966171168
        %v1335 = vunpack.c.0.s8 %v1334
        %v1336 = vlaneseq
        %v1337 = vshrl.u32 %v1336, 7
        %v1338 = vsub.s32 %v1335, %v1337
        %v1339 = vrot.slane %v1332, %v1338
        %v1341 = vunpack.c.l.s4 1966171168
        %v1342 = vunpack.c.0.s8 %v1341
        %v1343 = vlaneseq
        %v1344 = vshrl.u32 %v1343, 7
        %v1345 = vsub.s32 %v1342, %v1344
        %v1346 = vrot.slane %v1339, %v1345
        %v1348 = vlaneseq
        %vm1349 = vcmp.ge.s32.totalorder %v1348, 0
        %vm1350 = vcmp.lt.s32.totalorder %v1348, 256
        %vm1351 = vmand %vm1349, %vm1350
        %1352 = vst.msk [vmem:[%s285] sm:$0x3] %vm1351, %v1346
        %s1353 = sand.u32 %s182, 1
        %s1354 = scalar_lea.sflag [#allocation4], %s1353
        %s1355 = sand.u32 %s182, 1
        %s1356 = smul.addr %s1355, 2
        %s1357 = scalar_lea.vmem [#allocation3], %s1356
        // Predicated region
        $region49: #{znet_forward.1} parent=47 // pred_check
          %p1358 = pneg %p192
        $region50: #{znet_forward.1} parent=47 // pred_check_branch
          %1360 = sbr.rel (%p1358) target = $region52
        $region51: #{znet_forward.1} parent=47 // pred_region
          %s1361 = smul.u32 2, %s22
          %s1362 = ssub.s32 3, %s1361
          %p1363 = scmp.lt.s32.totalorder %s1362, 2
          %s1364 = scalar_select %p1363, %s1362, 2
          %s1365 = smul.u32 16, %s1364
          %s1367 = ssub.s32 32, %s1365
          %1368 = vsyncadd %s1354, %s1367
          %p1369 = scmp.ne.s32.totalorder 0, %s1365
          %s1370 = smul.addr %s1361, 16
          %s1371 = scalar_lea.hbm %s7, %s1370
          %s1372 = sshll.u32 %s1364, 4
          %s1373 = sshll.u32 %s1357, 4
          %s1374 = int_to_ptr.vmem [resolvable:$true] %s1373
          %1376 = dma.vmem_to_hbm [thread:$0]  (%p1369), %s1374, %s1372, %s1371, %s1354
        $region52: #{znet_forward.1} parent=47 // pred_fallthru
          _
      $region48: #{znet_forward.1} parent=5 // pred_fallthru
        _
      %p1377 = scmp.le.s32.totalorder 2, %s17
      // Predicated region
      $region53: #{znet_forward.1} parent=5 // pred_check
        %p1378 = pneg %p1377
      $region54: #{znet_forward.1} parent=5 // pred_check_branch
        %1380 = sbr.rel (%p1378) target = $region56
      $region55: #{znet_forward.1} parent=5 // pred_region
        %s1381 = ssub.s32 %s17, 2
        // Predicated region
        $region57: #{znet_forward.1} parent=55 // pred_check
          %p1382 = pneg %p198
        $region58: #{znet_forward.1} parent=55 // pred_check_branch
          %1384 = sbr.rel (%p1382) target = $region60
        $region59: #{znet_forward.1} parent=55 // pred_region
          %s1385 = sand.u32 %s183, 1
          %s1386 = scalar_lea.sflag [#allocation4], %s1385
          %s1387 = sand.u32 %s183, 1
          %s1388 = smul.addr %s1387, 2
          %s1389 = scalar_lea.vmem [#allocation3], %s1388
          %1390 = dma.done %s1386, 32
        $region60: #{znet_forward.1} parent=55 // pred_fallthru
          _
      $region56: #{znet_forward.1} parent=5 // pred_fallthru
        _
    $region6: #{znet_forward.1} parent=1 // loop_footer
      %s21 = sadd.s32 1, %s17
    $region7: #{znet_forward.1} parent=1 // loop_footer_branch
      %16 = sbr.rel target = $region3
    $region8: #{znet_forward.1} parent=1 // loop_exit
      _
    %1391 = vsyncpa [#allocation4], 1
    %s1392 = scalar_lea.sflag [#allocation4], 1
    %1393 = vsyncpa %s1392, 1

</llo_original>
